<compile_context>
chip_gen: v7x
topology: tpu7x:2x2x1
jax: 0.10.0
libtpu: 0.0.40
codegen_flags: <defaults>
</compile_context>

<pallas_src>
from typing import NamedTuple

import jax
import jax.numpy as jnp
from jax.experimental import pallas as pl
from jax.experimental.pallas import tpu as pltpu


def _round_up(x, m):
    return (x + m - 1) // m * m


def _cdiv(a, b):
    return (a + b - 1) // b


# ---------------------------------------------------------------------------
# Kernels
# ---------------------------------------------------------------------------
def _ffn_kernel_acc_in_out(x_ref, w1_ref, b1_ref, w2_ref, b2_ref, o_ref):
    """f32 output: the output block (block index (i, 0), constant over k) is
    resident for the whole reduction and used as the accumulator directly."""
    k = pl.program_id(1)

    @pl.when(k == 0)
    def _():
        o_ref[...] = jnp.broadcast_to(b2_ref[...], o_ref.shape)

    # First linear chunk: (tm, dim) @ (dim, tk) -> (tm, tk), f32 accumulation.
    h = jnp.dot(x_ref[...], w1_ref[...], preferred_element_type=jnp.float32)
    # Bias + ReLU in f32 (elementwise on the hidden chunk -> tiling is exact).
    h = jnp.maximum(h + b1_ref[...], 0.0)
    # Second linear partial sum; downcast h to the weight dtype for the MXU.
    o_ref[...] += jnp.dot(h.astype(w2_ref.dtype), w2_ref[...],
                          preferred_element_type=jnp.float32)


def _ffn_kernel_scratch(x_ref, w1_ref, b1_ref, w2_ref, b2_ref, o_ref, acc_ref):
    """Non-f32 output: accumulate in an f32 VMEM scratch, cast at final k."""
    k = pl.program_id(1)

    @pl.when(k == 0)
    def _():
        acc_ref[...] = jnp.broadcast_to(b2_ref[...], acc_ref.shape)

    h = jnp.dot(x_ref[...], w1_ref[...], preferred_element_type=jnp.float32)
    h = jnp.maximum(h + b1_ref[...], 0.0)
    acc_ref[...] += jnp.dot(h.astype(w2_ref.dtype), w2_ref[...],
                            preferred_element_type=jnp.float32)

    @pl.when(k == pl.num_programs(1) - 1)
    def _():
        o_ref[...] = acc_ref[...].astype(o_ref.dtype)


# ---------------------------------------------------------------------------
# Hardware query / tile selection
# ---------------------------------------------------------------------------
def _vmem_capacity_bytes():
    try:
        info = pltpu.get_tpu_info()
        cap = int(getattr(info, "vmem_capacity_bytes", 0))
        if cap > 0:
            return cap
    except Exception:
        pass
    return 128 * 2 ** 20  # v5e / v6e default; v7x reports its own 64 MiB.


def _footprint_bytes(tm, tk, dim_p, csz, osz, acc_in_out, wbuf):
    fb = (2 * tm * dim_p * csz          # x tile (double-buffered)
          + wbuf * dim_p * tk * csz     # W1 tiles
          + wbuf * tk * 4               # b1 chunks (f32)
          + wbuf * tk * dim_p * csz     # W2 tiles
          + 2 * dim_p * 4               # b2
          + 2 * tm * dim_p * osz)       # output tile
    if not acc_in_out:
        fb += tm * dim_p * 4            # f32 accumulator scratch
    return fb


def _choose_tiles(M, dim_p, hid_p, csz, osz, acc_in_out, vmem_budget,
                  force_two_row_tiles, wbuf, tm_user=None, tk_user=None):
    mcap = _round_up(M, 8)

    # Hidden (reduction) tile candidates (must divide hid_p, lane multiple).
    if tk_user is not None and hid_p % tk_user == 0 and tk_user % 128 == 0:
        tk_opts = [tk_user]
    else:
        tk_opts = sorted({t for t in (512, 256) if t <= hid_p and hid_p % t == 0},
                         reverse=True) or [hid_p]

    # Row tile candidates: biggest that fits VMEM, capped at 1024 and at M.
    if tm_user is not None:
        tm_opts = [max(8, min(_round_up(tm_user, 8), mcap))]
    else:
        cand = {8, 16, 32, 64, 128, 256, 512, min(mcap, 1024)}
        tm_opts = sorted({t for t in cand if t <= mcap}, reverse=True) or [8]

    tm, tk = tm_opts[-1], tk_opts[-1]
    for tm_c in tm_opts:
        hit = False
        for tk_c in tk_opts:
            if _footprint_bytes(tm_c, tk_c, dim_p, csz, osz,
                                acc_in_out, wbuf) <= vmem_budget:
                tm, tk, hit = tm_c, tk_c, True
                break
        if hit:
            break

    # Balance row tiles (padding waste < 8 rows); on 2-TC chips guarantee the
    # "parallel" axis has >= 2 tiles so both TensorCores get work.
    n_row = _cdiv(M, tm)
    if force_two_row_tiles and n_row < 2 and M > 8:
        n_row = 2
    tm_e = max(8, _round_up(_cdiv(M, n_row), 8))
    n_row = _cdiv(M, tm_e)
    return tm_e, tk, n_row


# ---------------------------------------------------------------------------
# Parameter preparation (hoisted out of the per-call path)
# ---------------------------------------------------------------------------
class FFNParams(NamedTuple):
    w1: jax.Array   # (dim_p, hid_p) compute dtype
    b1: jax.Array   # (1, hid_p)     f32
    w2: jax.Array   # (hid_p, dim_p) compute dtype
    b2: jax.Array   # (1, dim_p)     f32
    dim: int
    hidden: int
    dim_p: int
    hid_p: int


def prepare_params(w1, b1, w2, b2, compute_dtype=jnp.bfloat16):
    """Pad + cast weights ONCE.  Fast path: when dim/hidden are already
    lane-aligned only `astype` runs (a no-op if storage already matches
    `compute_dtype`).  Weights are stored as (in_features, out_features)."""
    dim, hidden = w1.shape
    cdt = jnp.dtype(compute_dtype)

    # 256-granular padding matches the v6e/v7x 256x256 MXU tile; 128 for tiny
    # dims to avoid over-padding (v5e's 128x128 MXU is fine either way).
    dim_p = _round_up(dim, 256) if dim >= 256 else _round_up(dim, 128)
    hid_p = _round_up(hidden, 256) if hidden >= 256 else _round_up(hidden, 128)

    if dim_p == dim and hid_p == hidden:
        w1p = w1.astype(cdt)
        w2p = w2.astype(cdt)
        b1p = b1.astype(jnp.float32).reshape(1, hidden)
        b2p = b2.astype(jnp.float32).reshape(1, dim)
    else:
        w1p = jnp.zeros((dim_p, hid_p), cdt).at[:dim, :hidden].set(w1.astype(cdt))
        w2p = jnp.zeros((hid_p, dim_p), cdt).at[:hidden, :dim].set(w2.astype(cdt))
        b1p = jnp.zeros((1, hid_p), jnp.float32).at[0, :hidden].set(
            b1.astype(jnp.float32))
        b2p = jnp.zeros((1, dim_p), jnp.float32).at[0, :dim].set(
            b2.astype(jnp.float32))

    return FFNParams(w1p, b1p, w2p, b2p, dim, hidden, dim_p, hid_p)


# ---------------------------------------------------------------------------
# Forward
# ---------------------------------------------------------------------------
def feed_forward(x, params: FFNParams, *, tm=None, tk=None, weight_buffers=2):
    """x: (..., dim).  `params` from prepare_params (padded, compute-dtype)."""
    orig_shape = x.shape
    dim, hidden = params.dim, params.hidden
    dim_p, hid_p = params.dim_p, params.hid_p
    assert orig_shape[-1] == dim, (orig_shape, dim)

    out_dtype = x.dtype
    cdt = params.w1.dtype
    csz = jnp.dtype(cdt).itemsize
    osz = jnp.dtype(out_dtype).itemsize

    x2d = x.reshape(-1, dim)
    M = x2d.shape[0]

    # ---- per-generation VMEM budget & tiles --------------------------------
    vmem_cap = _vmem_capacity_bytes()
    vmem_budget = int(vmem_cap * 0.85)          # headroom for compiler scratch
    two_core = vmem_cap <= 64 * 2 ** 20          # v7x heuristic (2 TCs, 64 MiB)

    acc_in_out = jnp.dtype(out_dtype) == jnp.float32
    wbuf = max(2, int(weight_buffers))

    tm_e, tk_e, n_row = _choose_tiles(
        M, dim_p, hid_p, csz, osz, acc_in_out, vmem_budget,
        force_two_row_tiles=two_core, wbuf=wbuf, tm_user=tm, tk_user=tk)
    M_p = n_row * tm_e
    n_k = hid_p // tk_e

    # ---- pad x (rows to M_p, cols to dim_p); fast path when aligned --------
    if M_p == M and dim_p == dim:
        xp = x2d.astype(cdt)
    else:
        xp = jnp.zeros((M_p, dim_p), cdt).at[:M, :dim].set(x2d.astype(cdt))

    # ---- specs --------------------------------------------------------------
    def _wspec(shape, index_map):
        # Optional deeper weight-tile buffering (e.g. 3 on v5e if DMA exposed);
        # default 2 = standard double buffering, no extra VMEM.
        if wbuf > 2:
            try:
                return pl.BlockSpec(shape, index_map,
                                    pipeline_mode=pl.Buffered(wbuf))
            except Exception:
                pass
        return pl.BlockSpec(shape, index_map)

    in_specs = [
        pl.BlockSpec((tm_e, dim_p), lambda i, k: (i, 0)),   # x rows
        _wspec((dim_p, tk_e), lambda i, k: (0, k)),         # W1 cols
        pl.BlockSpec((1, tk_e), lambda i, k: (0, k)),       # b1 chunk
        _wspec((tk_e, dim_p), lambda i, k: (k, 0)),         # W2 rows
        pl.BlockSpec((1, dim_p), lambda i, k: (0, 0)),      # b2
    ]
    out_spec = pl.BlockSpec((tm_e, dim_p), lambda i, k: (i, 0))

    if acc_in_out:
        kernel = _ffn_kernel_acc_in_out
        scratch_shapes = ()
    else:
        kernel = _ffn_kernel_scratch
        scratch_shapes = (pltpu.VMEM((tm_e, dim_p), jnp.float32),)

    # ---- cost estimate (weights re-streamed once per row tile) -------------
    flops = 4 * M_p * dim_p * hid_p
    bytes_accessed = int(
        M_p * dim_p * csz
        + n_row * (params.w1.size + params.w2.size) * csz
        + n_row * (params.b1.size + params.b2.size) * 4
        + M_p * dim_p * osz)
    cost = pl.CostEstimate(flops=flops, transcendentals=0,
                           bytes_accessed=bytes_accessed)

    out = pl.pallas_call(
        kernel,
        out_shape=jax.ShapeDtypeStruct((M_p, dim_p), out_dtype),
        grid_spec=pltpu.PrefetchScalarGridSpec(
            num_scalar_prefetch=0,
            grid=(n_row, n_k),
            in_specs=in_specs,
            out_specs=out_spec,
            scratch_shapes=scratch_shapes,
        ),
        compiler_params=pltpu.CompilerParams(
            dimension_semantics=("parallel", "arbitrary"),
            vmem_limit_bytes=vmem_budget,
        ),
        cost_estimate=cost,
    )(xp, params.w1, params.b1, params.w2, params.b2)

    return out[:M, :dim].reshape(orig_shape)


def init_params(key, dim, hidden_dim, dtype=jnp.float32):
    """Deterministic init mimicking PyTorch nn.Linear defaults
    (uniform +/- 1/sqrt(fan_in)); weights stored as (in, out)."""
    k1, k2, k3, k4 = jax.random.split(key, 4)
    bound1 = 1.0 / jnp.sqrt(dim)
    bound2 = 1.0 / jnp.sqrt(hidden_dim)
    w1 = jax.random.uniform(k1, (dim, hidden_dim), dtype, -bound1, bound1)
    b1 = jax.random.uniform(k2, (hidden_dim,), dtype, -bound1, bound1)
    w2 = jax.random.uniform(k3, (hidden_dim, dim), dtype, -bound2, bound2)
    b2 = jax.random.uniform(k4, (dim,), dtype, -bound2, bound2)
    return w1, b1, w2, b2


if __name__ == "__main__":
    key = jax.random.PRNGKey(0)
    k_x, k_p = jax.random.split(key)

    # Small but lane-friendly demo shapes (dim / hidden multiples of 128).
    batch, seq, dim, hidden_dim = 2, 8, 256, 512
    x = jax.random.normal(k_x, (batch, seq, dim), jnp.float32)
    w1, b1, w2, b2 = init_params(k_p, dim, hidden_dim)

    # Weight padding / bf16 casting happens ONCE here, not per forward call.
    params = prepare_params(w1, b1, w2, b2, compute_dtype=jnp.bfloat16)

    out = jax.block_until_ready(feed_forward(x, params))
    # Second call reuses the prepared weights (no per-call re-pad / re-cast).
    out2 = jax.block_until_ready(feed_forward(x, params))

    # Reference with the same bf16-operand / f32-accumulate quantization as
    # the kernel (same math as the PyTorch module forward; p=0 dropout = id).
    cdt = jnp.bfloat16
    x2d = x.reshape(-1, dim).astype(cdt)
    h_ref = jnp.dot(x2d, w1.astype(cdt),
                    preferred_element_type=jnp.float32) + b1
    h_ref = jnp.maximum(h_ref, 0.0)
    ref = jnp.dot(h_ref.astype(cdt), w2.astype(cdt),
                  preferred_element_type=jnp.float32) + b2
    ref = ref.reshape(batch, seq, dim).astype(x.dtype)

    assert out.shape == (batch, seq, dim)
    err = float(jnp.max(jnp.abs(out - ref)))
    assert jnp.allclose(out, ref, atol=2e-2, rtol=2e-2), err
    assert jnp.allclose(out2, out), "results differ across calls"

    print("KERNEL_OK")
</pallas_src>

<mosaic_0001>
module attributes {stable_mosaic.version = 11 : i64} {
  func.func @_ffn_kernel_acc_in_out(%arg0: i32, %arg1: i32, %arg2: memref<16x256xbf16, #tpu.memory_space<vmem>>, %arg3: memref<256x512xbf16, #tpu.memory_space<vmem>>, %arg4: memref<1x512xf32, #tpu.memory_space<vmem>>, %arg5: memref<512x256xbf16, #tpu.memory_space<vmem>>, %arg6: memref<1x256xf32, #tpu.memory_space<vmem>>, %arg7: memref<16x256xf32, #tpu.memory_space<vmem>>) attributes {dimension_semantics = [#tpu.dimension_semantics<parallel>, #tpu.dimension_semantics<arbitrary>], iteration_bounds = array<i64: 1, 1>, scalar_prefetch = 0 : i64, scratch_operands = 0 : i64, tpu.core_type = #tpu.core_type<tc>, window_params = [{transform_indices = @transform_0, window_bounds = array<i64: 16, 256>}, {transform_indices = @transform_1, window_bounds = array<i64: 256, 512>}, {transform_indices = @transform_2, window_bounds = array<i64: 1, 512>}, {transform_indices = @transform_3, window_bounds = array<i64: 512, 256>}, {pipeline_mode = #tpu.pipeline_mode<synchronous>, transform_indices = @transform_4, window_bounds = array<i64: 1, 256>}, {transform_indices = @transform_5, window_bounds = array<i64: 16, 256>}]} {
    %c0_i32 = arith.constant 0 : i32
    %0 = arith.cmpi eq, %arg1, %c0_i32 : i32
    %1 = arith.extui %0 : i1 to i32
    %c0_i32_0 = arith.constant 0 : i32
    %2 = arith.cmpi ne, %1, %c0_i32_0 : i32
    scf.if %2 {
      %c0_14 = arith.constant 0 : index
      %c0_15 = arith.constant 0 : index
      %17 = vector.load %arg6[%c0_14, %c0_15] : memref<1x256xf32, #tpu.memory_space<vmem>>, vector<1x256xf32>
      %18 = vector.shape_cast %17 : vector<1x256xf32> to vector<1x256xf32>
      %19 = vector.broadcast %18 : vector<1x256xf32> to vector<16x256xf32>
      %c0_16 = arith.constant 0 : index
      %c0_17 = arith.constant 0 : index
      %20 = vector.load %arg7[%c0_16, %c0_17] : memref<16x256xf32, #tpu.memory_space<vmem>>, vector<16x256xf32>
      tpu.vector_store %arg7[%c0_16, %c0_17], %19 {strides = array<i32>} : memref<16x256xf32, #tpu.memory_space<vmem>>, vector<16x256xf32>,
    } else {
    }
    %c0 = arith.constant 0 : index
    %c0_1 = arith.constant 0 : index
    %3 = vector.load %arg2[%c0, %c0_1] : memref<16x256xbf16, #tpu.memory_space<vmem>>, vector<16x256xbf16>
    %c0_2 = arith.constant 0 : index
    %c0_3 = arith.constant 0 : index
    %4 = vector.load %arg3[%c0_2, %c0_3] : memref<256x512xbf16, #tpu.memory_space<vmem>>, vector<256x512xbf16>
    %cst = arith.constant dense<0.000000e+00> : vector<16x512xf32>
    %5 = tpu.matmul %3, %4, %cst {dimension_numbers = #tpu.dot_dimension_numbers<[1], [0], [0], [1], [0, 0, 1, 1], [], []>} : vector<16x256xbf16>, vector<256x512xbf16>, vector<16x512xf32> -> vector<16x512xf32>
    %c0_4 = arith.constant 0 : index
    %c0_5 = arith.constant 0 : index
    %6 = vector.load %arg4[%c0_4, %c0_5] : memref<1x512xf32, #tpu.memory_space<vmem>>, vector<1x512xf32>
    %7 = vector.broadcast %6 : vector<1x512xf32> to vector<16x512xf32>
    %8 = arith.addf %5, %7 : vector<16x512xf32>
    %cst_6 = arith.constant 0.000000e+00 : f32
    %9 = vector.broadcast %cst_6 : f32 to vector<16x512xf32>
    %10 = arith.maximumf %8, %9 : vector<16x512xf32>
    %c0_7 = arith.constant 0 : index
    %c0_8 = arith.constant 0 : index
    %11 = vector.load %arg7[%c0_7, %c0_8] : memref<16x256xf32, #tpu.memory_space<vmem>>, vector<16x256xf32>
    %12 = arith.truncf %10 : vector<16x512xf32> to vector<16x512xbf16>
    %c0_9 = arith.constant 0 : index
    %c0_10 = arith.constant 0 : index
    %13 = vector.load %arg5[%c0_9, %c0_10] : memref<512x256xbf16, #tpu.memory_space<vmem>>, vector<512x256xbf16>
    %cst_11 = arith.constant dense<0.000000e+00> : vector<16x256xf32>
    %14 = tpu.matmul %12, %13, %cst_11 {dimension_numbers = #tpu.dot_dimension_numbers<[1], [0], [0], [1], [0, 0, 1, 1], [], []>} : vector<16x512xbf16>, vector<512x256xbf16>, vector<16x256xf32> -> vector<16x256xf32>
    %15 = arith.addf %11, %14 : vector<16x256xf32>
    %c0_12 = arith.constant 0 : index
    %c0_13 = arith.constant 0 : index
    %16 = vector.load %arg7[%c0_12, %c0_13] : memref<16x256xf32, #tpu.memory_space<vmem>>, vector<16x256xf32>
    tpu.vector_store %arg7[%c0_12, %c0_13], %15 {strides = array<i32>} : memref<16x256xf32, #tpu.memory_space<vmem>>, vector<16x256xf32>,
    return
  }
  func.func @transform_0(%arg0: i32, %arg1: i32) -> (i32, i32) {
    %c0_i32 = arith.constant 0 : i32
    %c0_i32_0 = arith.constant 0 : i32
    return %arg0, %c0_i32 : i32, i32
  }
  func.func @transform_1(%arg0: i32, %arg1: i32) -> (i32, i32) {
    %c0_i32 = arith.constant 0 : i32
    %c0_i32_0 = arith.constant 0 : i32
    return %c0_i32, %arg1 : i32, i32
  }
  func.func @transform_2(%arg0: i32, %arg1: i32) -> (i32, i32) {
    %c0_i32 = arith.constant 0 : i32
    %c0_i32_0 = arith.constant 0 : i32
    return %c0_i32, %arg1 : i32, i32
  }
  func.func @transform_3(%arg0: i32, %arg1: i32) -> (i32, i32) {
    %c0_i32 = arith.constant 0 : i32
    %c0_i32_0 = arith.constant 0 : i32
    return %arg1, %c0_i32 : i32, i32
  }
  func.func @transform_4(%arg0: i32, %arg1: i32) -> (i32, i32) {
    %c0_i32 = arith.constant 0 : i32
    %c0_i32_0 = arith.constant 0 : i32
    %c0_i32_1 = arith.constant 0 : i32
    return %c0_i32, %c0_i32_0 : i32, i32
  }
  func.func @transform_5(%arg0: i32, %arg1: i32) -> (i32, i32) {
    %c0_i32 = arith.constant 0 : i32
    %c0_i32_0 = arith.constant 0 : i32
    return %arg0, %c0_i32 : i32, i32
  }
}

</mosaic_0001>

<llo_original>
// kernel: tpu_custom_call.1
$region0: #{tpu_custom_call.1}
  #allocation0 [shape = 'u32[]', space=smem, size = 0x4, offset = 0x4, fixed_abs, tag = 'smem constant byte address 0x4 - core index']
  #allocation1 [shape = 'u32[144,128]{1,0:T(1,128)}', space=vmem, size = 0x12000, scoped, tag = 'internal scratch']
  %s0 = inlined_call_operand.hbm [shape: bf16[16,256], index: 0, kind: input, shape index: {}]
  %s1 = inlined_call_operand.hbm [shape: bf16[256,512], index: 1, kind: input, shape index: {}]
  %s2 = inlined_call_operand.hbm [shape: f32[1,512], index: 2, kind: input, shape index: {}]
  %s3 = inlined_call_operand.hbm [shape: bf16[512,256], index: 3, kind: input, shape index: {}]
  %s4 = inlined_call_operand.hbm [shape: f32[1,256], index: 4, kind: input, shape index: {}]
  %s5 = inlined_call_operand.hbm [shape: f32[16,256], index: 5, kind: output, shape index: {}]
  %s6 = sld [smem:[#allocation0]]
  $region54: #{tpu_custom_call.1} parent=0
    _
  %s8 = ssub.s32 1, %s6
  %s9 = scalar_select 0, %s8, %s6
  $region1: #{tpu_custom_call.1} parent=0
    #allocation2 [shape = 'u8[8192]{0}', space=vmem, size = 0x2000, scoped, tag = 'input window, operand 0, single buffered']
    #allocation3 [shape = 's32[1]{0}', space=sflag, size = 0x4, scoped, tag = 'scoped memory for tpu_custom_call.1']
    #allocation4 [shape = 's32[1]{0}', space=sflag, size = 0x4, scoped, tag = 'scoped memory for tpu_custom_call.1']
    #allocation5 [shape = 'u8[262144]{0}', space=vmem, size = 0x40000, scoped, tag = 'input window, operand 1, single buffered']
    #allocation6 [shape = 's32[1]{0}', space=sflag, size = 0x4, scoped, tag = 'scoped memory for tpu_custom_call.1']
    #allocation7 [shape = 'u8[2048]{0}', space=vmem, size = 0x800, scoped, tag = 'input window, operand 2, single buffered']
    #allocation8 [shape = 'u8[262144]{0}', space=vmem, size = 0x40000, scoped, tag = 'input window, operand 3, single buffered']
    #allocation9 [shape = 's32[1]{0}', space=sflag, size = 0x4, scoped, tag = 'scoped memory for tpu_custom_call.1']
    #allocation10 [shape = 'u8[1024]{0}', space=vmem, size = 0x400, scoped, tag = 'input window, operand 4, single buffered']
    #allocation11 [shape = 'u8[16384]{0}', space=vmem, size = 0x4000, scoped, tag = 'output window, operand 0, single buffered']
    %10 = vsyncpa [#allocation3], 0
    %11 = vsyncpa [#allocation6], 0
    %12 = vsyncpa [#allocation9], 0
    %13 = vsyncpa [#allocation4], 0
    // Predicated region
    $region2: #{tpu_custom_call.1} parent=1 // pred_check
      _
    $region3: #{tpu_custom_call.1} parent=1 // pred_check_branch
      %15 = sbr.rel (0) target = $region5
    $region4: #{tpu_custom_call.1} parent=1 // pred_region
      %s17 = ssub.s32 256, 256
      %18 = vsyncadd [#allocation3], %s17
      %s19 = sshll.u32 [#allocation2], 4
      %s20 = int_to_ptr.vmem [resolvable:$true] %s19
      %25 = dma.hbm_to_vmem [thread:$0]  %s0, 256, %s20, [#allocation3], 128, 128, 8
    $region5: #{tpu_custom_call.1} parent=1 // pred_fallthru
      _
    // Predicated region
    $region6: #{tpu_custom_call.1} parent=1 // pred_check
      _
    $region7: #{tpu_custom_call.1} parent=1 // pred_check_branch
      %27 = sbr.rel (0) target = $region9
    $region8: #{tpu_custom_call.1} parent=1 // pred_region
      %s29 = ssub.s32 8192, 8192
      %30 = vsyncadd [#allocation6], %s29
      %s31 = sshll.u32 [#allocation5], 4
      %s32 = int_to_ptr.vmem [resolvable:$true] %s31
      %37 = dma.hbm_to_vmem [thread:$0]  %s1, 8192, %s32, [#allocation6], 256, 256, 16
    $region9: #{tpu_custom_call.1} parent=1 // pred_fallthru
      _
    // Predicated region
    $region10: #{tpu_custom_call.1} parent=1 // pred_check
      _
    $region11: #{tpu_custom_call.1} parent=1 // pred_check_branch
      %39 = sbr.rel (0) target = $region13
    $region12: #{tpu_custom_call.1} parent=1 // pred_region
      %s41 = ssub.s32 64, 64
      %42 = vsyncadd [#allocation6], %s41
      %s44 = sshll.u32 [#allocation7], 4
      %s45 = int_to_ptr.vmem [resolvable:$true] %s44
      %47 = dma.hbm_to_vmem [thread:$0]  %s2, 64, %s45, [#allocation6]
    $region13: #{tpu_custom_call.1} parent=1 // pred_fallthru
      _
    // Predicated region
    $region14: #{tpu_custom_call.1} parent=1 // pred_check
      _
    $region15: #{tpu_custom_call.1} parent=1 // pred_check_branch
      %49 = sbr.rel (0) target = $region17
    $region16: #{tpu_custom_call.1} parent=1 // pred_region
      %s51 = ssub.s32 8192, 8192
      %52 = vsyncadd [#allocation9], %s51
      %s53 = sshll.u32 [#allocation8], 4
      %s54 = int_to_ptr.vmem [resolvable:$true] %s53
      %59 = dma.hbm_to_vmem [thread:$0]  %s3, 8192, %s54, [#allocation9], 128, 128, 8
    $region17: #{tpu_custom_call.1} parent=1 // pred_fallthru
      _
    // Predicated region
    $region18: #{tpu_custom_call.1} parent=1 // pred_check
      _
    $region19: #{tpu_custom_call.1} parent=1 // pred_check_branch
      %61 = sbr.rel (0) target = $region21
    $region20: #{tpu_custom_call.1} parent=1 // pred_region
      %s63 = ssub.s32 32, 32
      %64 = vsyncadd [#allocation9], %s63
      %s66 = sshll.u32 [#allocation10], 4
      %s67 = int_to_ptr.vmem [resolvable:$true] %s66
      %69 = dma.hbm_to_vmem [thread:$0]  %s4, 32, %s67, [#allocation9]
    $region21: #{tpu_custom_call.1} parent=1 // pred_fallthru
      _
    // Predicated region
    $region22: #{tpu_custom_call.1} parent=1 // pred_check
      _
    $region23: #{tpu_custom_call.1} parent=1 // pred_check_branch
      %71 = sbr.rel (0) target = $region25
    $region24: #{tpu_custom_call.1} parent=1 // pred_region
      %72 = dma.done [#allocation3], 256
    $region25: #{tpu_custom_call.1} parent=1 // pred_fallthru
      _
    // Predicated region
    $region26: #{tpu_custom_call.1} parent=1 // pred_check
      _
    $region27: #{tpu_custom_call.1} parent=1 // pred_check_branch
      %74 = sbr.rel (0) target = $region29
    $region28: #{tpu_custom_call.1} parent=1 // pred_region
      %75 = dma.done [#allocation6], 8192
    $region29: #{tpu_custom_call.1} parent=1 // pred_fallthru
      _
    // Predicated region
    $region30: #{tpu_custom_call.1} parent=1 // pred_check
      _
    $region31: #{tpu_custom_call.1} parent=1 // pred_check_branch
      %77 = sbr.rel (0) target = $region33
    $region32: #{tpu_custom_call.1} parent=1 // pred_region
      %78 = dma.done [#allocation6], 64
    $region33: #{tpu_custom_call.1} parent=1 // pred_fallthru
      _
    // Predicated region
    $region34: #{tpu_custom_call.1} parent=1 // pred_check
      _
    $region35: #{tpu_custom_call.1} parent=1 // pred_check_branch
      %80 = sbr.rel (0) target = $region37
    $region36: #{tpu_custom_call.1} parent=1 // pred_region
      %81 = dma.done [#allocation9], 8192
    $region37: #{tpu_custom_call.1} parent=1 // pred_fallthru
      _
    // Predicated region
    $region38: #{tpu_custom_call.1} parent=1 // pred_check
      _
    $region39: #{tpu_custom_call.1} parent=1 // pred_check_branch
      %83 = sbr.rel (0) target = $region41
    $region40: #{tpu_custom_call.1} parent=1 // pred_region
      %84 = dma.done [#allocation9], 32
    $region41: #{tpu_custom_call.1} parent=1 // pred_fallthru
      _
    %p85 = scmp.eq.s32.totalorder 0, 0
    // Predicated region
    $region42: #{tpu_custom_call.1} parent=1 // pred_check
      %p86 = pneg %p85
    $region43: #{tpu_custom_call.1} parent=1 // pred_check_branch
      %88 = sbr.rel (%p86) target = $region45
    $region44: #{tpu_custom_call.1} parent=1 // pred_region
      %v89 = vld [vmem:[#allocation10] sm:$0x3]
      %v91 = vlaneseq
      %v92 = vshrl.u32 %v91, 7
      %v93 = vsub.s32 0, %v92
      %v94 = vrot.slane %v89, %v93
      %v95 = vlaneseq
      %v96 = vshrl.u32 %v95, 7
      %v97 = vsub.s32 1, %v96
      %v98 = vrot.slane %v89, %v97
      %101 = vst [vmem:[#allocation11] sm:$0xff] %v94
      %102 = vst [vmem:[#allocation11 + $0x8] sm:$0xff] %v98
      %103 = vst [vmem:[#allocation11 + $0x10] sm:$0xff] %v94
      %104 = vst [vmem:[#allocation11 + $0x18] sm:$0xff] %v98
    $region45: #{tpu_custom_call.1} parent=1 // pred_fallthru
      _
    %v105 = vld [vmem:[#allocation2] sm:$0xff]
    %v106 = vld [vmem:[#allocation2 + $0x8] sm:$0xff]
    %v107 = vld [vmem:[#allocation5] sm:$0xff]
    %v108 = vld [vmem:[#allocation5 + $0x8] sm:$0xff]
    %v109 = vld [vmem:[#allocation5 + $0x10] sm:$0xff]
    %v110 = vld [vmem:[#allocation5 + $0x18] sm:$0xff]
    %v111 = vld [vmem:[#allocation5 + $0x20] sm:$0xff]
    %v112 = vld [vmem:[#allocation5 + $0x28] sm:$0xff]
    %v113 = vld [vmem:[#allocation5 + $0x30] sm:$0xff]
    %v114 = vld [vmem:[#allocation5 + $0x38] sm:$0xff]
    %v115 = vld [vmem:[#allocation5 + $0x40] sm:$0xff]
    %v116 = vld [vmem:[#allocation5 + $0x48] sm:$0xff]
    %v117 = vld [vmem:[#allocation5 + $0x50] sm:$0xff]
    %v118 = vld [vmem:[#allocation5 + $0x58] sm:$0xff]
    %v119 = vld [vmem:[#allocation5 + $0x60] sm:$0xff]
    %v120 = vld [vmem:[#allocation5 + $0x68] sm:$0xff]
    %v121 = vld [vmem:[#allocation5 + $0x70] sm:$0xff]
    %v122 = vld [vmem:[#allocation5 + $0x78] sm:$0xff]
    %v123 = vld [vmem:[#allocation5 + $0x80] sm:$0xff]
    %v124 = vld [vmem:[#allocation5 + $0x88] sm:$0xff]
    %v125 = vld [vmem:[#allocation5 + $0x90] sm:$0xff]
    %v126 = vld [vmem:[#allocation5 + $0x98] sm:$0xff]
    %v127 = vld [vmem:[#allocation5 + $0xa0] sm:$0xff]
    %v128 = vld [vmem:[#allocation5 + $0xa8] sm:$0xff]
    %v129 = vld [vmem:[#allocation5 + $0xb0] sm:$0xff]
    %v130 = vld [vmem:[#allocation5 + $0xb8] sm:$0xff]
    %v131 = vld [vmem:[#allocation5 + $0xc0] sm:$0xff]
    %v132 = vld [vmem:[#allocation5 + $0xc8] sm:$0xff]
    %v133 = vld [vmem:[#allocation5 + $0xd0] sm:$0xff]
    %v134 = vld [vmem:[#allocation5 + $0xd8] sm:$0xff]
    %v135 = vld [vmem:[#allocation5 + $0xe0] sm:$0xff]
    %v136 = vld [vmem:[#allocation5 + $0xe8] sm:$0xff]
    %v137 = vld [vmem:[#allocation5 + $0xf0] sm:$0xff]
    %v138 = vld [vmem:[#allocation5 + $0xf8] sm:$0xff]
    %v139 = vld [vmem:[#allocation5 + $0x100] sm:$0xff]
    %v140 = vld [vmem:[#allocation5 + $0x108] sm:$0xff]
    %v141 = vld [vmem:[#allocation5 + $0x110] sm:$0xff]
    %v142 = vld [vmem:[#allocation5 + $0x118] sm:$0xff]
    %v143 = vld [vmem:[#allocation5 + $0x120] sm:$0xff]
    %v144 = vld [vmem:[#allocation5 + $0x128] sm:$0xff]
    %v145 = vld [vmem:[#allocation5 + $0x130] sm:$0xff]
    %v146 = vld [vmem:[#allocation5 + $0x138] sm:$0xff]
    %v147 = vld [vmem:[#allocation5 + $0x140] sm:$0xff]
    %v148 = vld [vmem:[#allocation5 + $0x148] sm:$0xff]
    %v149 = vld [vmem:[#allocation5 + $0x150] sm:$0xff]
    %v150 = vld [vmem:[#allocation5 + $0x158] sm:$0xff]
    %v151 = vld [vmem:[#allocation5 + $0x160] sm:$0xff]
    %v152 = vld [vmem:[#allocation5 + $0x168] sm:$0xff]
    %v153 = vld [vmem:[#allocation5 + $0x170] sm:$0xff]
    %v154 = vld [vmem:[#allocation5 + $0x178] sm:$0xff]
    %v155 = vld [vmem:[#allocation5 + $0x180] sm:$0xff]
    %v156 = vld [vmem:[#allocation5 + $0x188] sm:$0xff]
    %v157 = vld [vmem:[#allocation5 + $0x190] sm:$0xff]
    %v158 = vld [vmem:[#allocation5 + $0x198] sm:$0xff]
    %v159 = vld [vmem:[#allocation5 + $0x1a0] sm:$0xff]
    %v160 = vld [vmem:[#allocation5 + $0x1a8] sm:$0xff]
    %v161 = vld [vmem:[#allocation5 + $0x1b0] sm:$0xff]
    %v162 = vld [vmem:[#allocation5 + $0x1b8] sm:$0xff]
    %v163 = vld [vmem:[#allocation5 + $0x1c0] sm:$0xff]
    %v164 = vld [vmem:[#allocation5 + $0x1c8] sm:$0xff]
    %v165 = vld [vmem:[#allocation5 + $0x1d0] sm:$0xff]
    %v166 = vld [vmem:[#allocation5 + $0x1d8] sm:$0xff]
    %v167 = vld [vmem:[#allocation5 + $0x1e0] sm:$0xff]
    %v168 = vld [vmem:[#allocation5 + $0x1e8] sm:$0xff]
    %v169 = vld [vmem:[#allocation5 + $0x1f0] sm:$0xff]
    %v170 = vld [vmem:[#allocation5 + $0x1f8] sm:$0xff]
    %v171 = vld [vmem:[#allocation7] sm:$0xf]
    %v173 = vlaneseq
    %v174 = vshrl.u32 %v173, 7
    %v175 = vsub.s32 0, %v174
    %v176 = vrot.slane %v171, %v175
    %v177 = vlaneseq
    %v178 = vshrl.u32 %v177, 7
    %v179 = vsub.s32 1, %v178
    %v180 = vrot.slane %v171, %v179
    %v181 = vlaneseq
    %v182 = vshrl.u32 %v181, 7
    %v183 = vsub.s32 2, %v182
    %v184 = vrot.slane %v171, %v183
    %v185 = vlaneseq
    %v186 = vshrl.u32 %v185, 7
    %v187 = vsub.s32 3, %v186
    %v188 = vrot.slane %v171, %v187
    %v195 = vunpack.c.l.b16 %v105
    %v196 = vunpack.c.h.b16 %v105
    %v197 = vunpack.c.l.b16 %v106
    %v198 = vunpack.c.h.b16 %v106
    %v199 = vpack.c.b16 %v197, %v195
    %v200 = vpack.c.b16 %v198, %v196
    %v267 = vunpack.c.l.b16 %v107
    %v268 = vunpack.c.h.b16 %v107
    %v269 = vunpack.c.l.b16 %v108
    %v270 = vunpack.c.h.b16 %v108
    %v271 = vunpack.c.l.b16 %v109
    %v272 = vunpack.c.h.b16 %v109
    %v273 = vunpack.c.l.b16 %v110
    %v274 = vunpack.c.h.b16 %v110
    %v275 = vunpack.c.l.b16 %v111
    %v276 = vunpack.c.h.b16 %v111
    %v277 = vunpack.c.l.b16 %v112
    %v278 = vunpack.c.h.b16 %v112
    %v279 = vunpack.c.l.b16 %v113
    %v280 = vunpack.c.h.b16 %v113
    %v281 = vunpack.c.l.b16 %v114
    %v282 = vunpack.c.h.b16 %v114
    %v283 = vunpack.c.l.b16 %v115
    %v284 = vunpack.c.h.b16 %v115
    %v285 = vunpack.c.l.b16 %v116
    %v286 = vunpack.c.h.b16 %v116
    %v287 = vunpack.c.l.b16 %v117
    %v288 = vunpack.c.h.b16 %v117
    %v289 = vunpack.c.l.b16 %v118
    %v290 = vunpack.c.h.b16 %v118
    %v291 = vunpack.c.l.b16 %v119
    %v292 = vunpack.c.h.b16 %v119
    %v293 = vunpack.c.l.b16 %v120
    %v294 = vunpack.c.h.b16 %v120
    %v295 = vunpack.c.l.b16 %v121
    %v296 = vunpack.c.h.b16 %v121
    %v297 = vunpack.c.l.b16 %v122
    %v298 = vunpack.c.h.b16 %v122
    %v299 = vunpack.c.l.b16 %v123
    %v300 = vunpack.c.h.b16 %v123
    %v301 = vunpack.c.l.b16 %v124
    %v302 = vunpack.c.h.b16 %v124
    %v303 = vunpack.c.l.b16 %v125
    %v304 = vunpack.c.h.b16 %v125
    %v305 = vunpack.c.l.b16 %v126
    %v306 = vunpack.c.h.b16 %v126
    %v307 = vunpack.c.l.b16 %v127
    %v308 = vunpack.c.h.b16 %v127
    %v309 = vunpack.c.l.b16 %v128
    %v310 = vunpack.c.h.b16 %v128
    %v311 = vunpack.c.l.b16 %v129
    %v312 = vunpack.c.h.b16 %v129
    %v313 = vunpack.c.l.b16 %v130
    %v314 = vunpack.c.h.b16 %v130
    %v315 = vunpack.c.l.b16 %v131
    %v316 = vunpack.c.h.b16 %v131
    %v317 = vunpack.c.l.b16 %v132
    %v318 = vunpack.c.h.b16 %v132
    %v319 = vunpack.c.l.b16 %v133
    %v320 = vunpack.c.h.b16 %v133
    %v321 = vunpack.c.l.b16 %v134
    %v322 = vunpack.c.h.b16 %v134
    %v323 = vunpack.c.l.b16 %v135
    %v324 = vunpack.c.h.b16 %v135
    %v325 = vunpack.c.l.b16 %v136
    %v326 = vunpack.c.h.b16 %v136
    %v327 = vunpack.c.l.b16 %v137
    %v328 = vunpack.c.h.b16 %v137
    %v329 = vunpack.c.l.b16 %v138
    %v330 = vunpack.c.h.b16 %v138
    %v331 = vunpack.c.l.b16 %v139
    %v332 = vunpack.c.h.b16 %v139
    %v333 = vunpack.c.l.b16 %v140
    %v334 = vunpack.c.h.b16 %v140
    %v335 = vunpack.c.l.b16 %v141
    %v336 = vunpack.c.h.b16 %v141
    %v337 = vunpack.c.l.b16 %v142
    %v338 = vunpack.c.h.b16 %v142
    %v339 = vunpack.c.l.b16 %v143
    %v340 = vunpack.c.h.b16 %v143
    %v341 = vunpack.c.l.b16 %v144
    %v342 = vunpack.c.h.b16 %v144
    %v343 = vunpack.c.l.b16 %v145
    %v344 = vunpack.c.h.b16 %v145
    %v345 = vunpack.c.l.b16 %v146
    %v346 = vunpack.c.h.b16 %v146
    %v347 = vunpack.c.l.b16 %v147
    %v348 = vunpack.c.h.b16 %v147
    %v349 = vunpack.c.l.b16 %v148
    %v350 = vunpack.c.h.b16 %v148
    %v351 = vunpack.c.l.b16 %v149
    %v352 = vunpack.c.h.b16 %v149
    %v353 = vunpack.c.l.b16 %v150
    %v354 = vunpack.c.h.b16 %v150
    %v355 = vunpack.c.l.b16 %v151
    %v356 = vunpack.c.h.b16 %v151
    %v357 = vunpack.c.l.b16 %v152
    %v358 = vunpack.c.h.b16 %v152
    %v359 = vunpack.c.l.b16 %v153
    %v360 = vunpack.c.h.b16 %v153
    %v361 = vunpack.c.l.b16 %v154
    %v362 = vunpack.c.h.b16 %v154
    %v363 = vunpack.c.l.b16 %v155
    %v364 = vunpack.c.h.b16 %v155
    %v365 = vunpack.c.l.b16 %v156
    %v366 = vunpack.c.h.b16 %v156
    %v367 = vunpack.c.l.b16 %v157
    %v368 = vunpack.c.h.b16 %v157
    %v369 = vunpack.c.l.b16 %v158
    %v370 = vunpack.c.h.b16 %v158
    %v371 = vunpack.c.l.b16 %v159
    %v372 = vunpack.c.h.b16 %v159
    %v373 = vunpack.c.l.b16 %v160
    %v374 = vunpack.c.h.b16 %v160
    %v375 = vunpack.c.l.b16 %v161
    %v376 = vunpack.c.h.b16 %v161
    %v377 = vunpack.c.l.b16 %v162
    %v378 = vunpack.c.h.b16 %v162
    %v379 = vunpack.c.l.b16 %v163
    %v380 = vunpack.c.h.b16 %v163
    %v381 = vunpack.c.l.b16 %v164
    %v382 = vunpack.c.h.b16 %v164
    %v383 = vunpack.c.l.b16 %v165
    %v384 = vunpack.c.h.b16 %v165
    %v385 = vunpack.c.l.b16 %v166
    %v386 = vunpack.c.h.b16 %v166
    %v387 = vunpack.c.l.b16 %v167
    %v388 = vunpack.c.h.b16 %v167
    %v389 = vunpack.c.l.b16 %v168
    %v390 = vunpack.c.h.b16 %v168
    %v391 = vunpack.c.l.b16 %v169
    %v392 = vunpack.c.h.b16 %v169
    %v393 = vunpack.c.l.b16 %v170
    %v394 = vunpack.c.h.b16 %v170
    %v395 = vpack.c.b16 %v271, %v267
    %v396 = vpack.c.b16 %v272, %v268
    %v397 = vpack.c.b16 %v273, %v269
    %v398 = vpack.c.b16 %v274, %v270
    %v399 = vpack.c.b16 %v279, %v275
    %v400 = vpack.c.b16 %v280, %v276
    %v401 = vpack.c.b16 %v281, %v277
    %v402 = vpack.c.b16 %v282, %v278
    %v403 = vpack.c.b16 %v287, %v283
    %v404 = vpack.c.b16 %v288, %v284
    %v405 = vpack.c.b16 %v289, %v285
    %v406 = vpack.c.b16 %v290, %v286
    %v407 = vpack.c.b16 %v295, %v291
    %v408 = vpack.c.b16 %v296, %v292
    %v409 = vpack.c.b16 %v297, %v293
    %v410 = vpack.c.b16 %v298, %v294
    %v411 = vpack.c.b16 %v303, %v299
    %v412 = vpack.c.b16 %v304, %v300
    %v413 = vpack.c.b16 %v305, %v301
    %v414 = vpack.c.b16 %v306, %v302
    %v415 = vpack.c.b16 %v311, %v307
    %v416 = vpack.c.b16 %v312, %v308
    %v417 = vpack.c.b16 %v313, %v309
    %v418 = vpack.c.b16 %v314, %v310
    %v419 = vpack.c.b16 %v319, %v315
    %v420 = vpack.c.b16 %v320, %v316
    %v421 = vpack.c.b16 %v321, %v317
    %v422 = vpack.c.b16 %v322, %v318
    %v423 = vpack.c.b16 %v327, %v323
    %v424 = vpack.c.b16 %v328, %v324
    %v425 = vpack.c.b16 %v329, %v325
    %v426 = vpack.c.b16 %v330, %v326
    %v427 = vpack.c.b16 %v335, %v331
    %v428 = vpack.c.b16 %v336, %v332
    %v429 = vpack.c.b16 %v337, %v333
    %v430 = vpack.c.b16 %v338, %v334
    %v431 = vpack.c.b16 %v343, %v339
    %v432 = vpack.c.b16 %v344, %v340
    %v433 = vpack.c.b16 %v345, %v341
    %v434 = vpack.c.b16 %v346, %v342
    %v435 = vpack.c.b16 %v351, %v347
    %v436 = vpack.c.b16 %v352, %v348
    %v437 = vpack.c.b16 %v353, %v349
    %v438 = vpack.c.b16 %v354, %v350
    %v439 = vpack.c.b16 %v359, %v355
    %v440 = vpack.c.b16 %v360, %v356
    %v441 = vpack.c.b16 %v361, %v357
    %v442 = vpack.c.b16 %v362, %v358
    %v443 = vpack.c.b16 %v367, %v363
    %v444 = vpack.c.b16 %v368, %v364
    %v445 = vpack.c.b16 %v369, %v365
    %v446 = vpack.c.b16 %v370, %v366
    %v447 = vpack.c.b16 %v375, %v371
    %v448 = vpack.c.b16 %v376, %v372
    %v449 = vpack.c.b16 %v377, %v373
    %v450 = vpack.c.b16 %v378, %v374
    %v451 = vpack.c.b16 %v383, %v379
    %v452 = vpack.c.b16 %v384, %v380
    %v453 = vpack.c.b16 %v385, %v381
    %v454 = vpack.c.b16 %v386, %v382
    %v455 = vpack.c.b16 %v391, %v387
    %v456 = vpack.c.b16 %v392, %v388
    %v457 = vpack.c.b16 %v393, %v389
    %v458 = vpack.c.b16 %v394, %v390
    %523 = vmatprep.subr.bf16.mxu0 %v396
    %524 = vmatpush1.bf16.msra.mxu0 %v395
    %525 = vmatprep.subr.bf16.mxu0 %v400
    %526 = vmatpush1.bf16.msra.mxu0 %v399
    %527 = vmatprep.subr.bf16.mxu0 %v404
    %528 = vmatpush1.bf16.msra.mxu0 %v403
    %529 = vmatprep.subr.bf16.mxu0 %v408
    %530 = vmatpush1.bf16.msra.mxu0 %v407
    %531 = vmatprep.subr.bf16.mxu0 %v412
    %532 = vmatpush1.bf16.msra.mxu0 %v411
    %533 = vmatprep.subr.bf16.mxu0 %v416
    %534 = vmatpush1.bf16.msra.mxu0 %v415
    %535 = vmatprep.subr.bf16.mxu0 %v420
    %536 = vmatpush1.bf16.msra.mxu0 %v419
    %537 = vmatprep.subr.bf16.mxu0 %v424
    %538 = vmatpush1.bf16.msra.mxu0 %v423
    %539 = vmatprep.subr.bf16.mxu0 %v428
    %540 = vmatpush1.bf16.msra.mxu0 %v427
    %541 = vmatprep.subr.bf16.mxu0 %v432
    %542 = vmatpush1.bf16.msra.mxu0 %v431
    %543 = vmatprep.subr.bf16.mxu0 %v436
    %544 = vmatpush1.bf16.msra.mxu0 %v435
    %545 = vmatprep.subr.bf16.mxu0 %v440
    %546 = vmatpush1.bf16.msra.mxu0 %v439
    %547 = vmatprep.subr.bf16.mxu0 %v444
    %548 = vmatpush1.bf16.msra.mxu0 %v443
    %549 = vmatprep.subr.bf16.mxu0 %v448
    %550 = vmatpush1.bf16.msra.mxu0 %v447
    %551 = vmatprep.subr.bf16.mxu0 %v452
    %552 = vmatpush1.bf16.msra.mxu0 %v451
    %553 = vmatprep.subr.bf16.mxu0 %v456
    %554 = vmatpush1.bf16.msra.mxu0 %v455
    %555 = vmatprep.mubr.bf16.mxu0 %v200
    %556 = vmatmul.mubr.bf16.gmra.mrb[0].mxu0 %v199
    %v557 = vpop.f32.mrb[0].mxu0
    %v558 = vadd.f32 %v176, %v557
    %v559 = vpop.f32.mrb[0].mxu0
    %v560 = vadd.f32 %v180, %v559
    %v561 = vpop.f32.mrb[0].mxu0
    %v562 = vadd.f32 %v176, %v561
    %v563 = vpop.f32.mrb[0].mxu0
    %v564 = vadd.f32 %v180, %v563
    %565 = vdwg.mxu0
    %566 = vmatprep.subr.bf16.mxu0 %v398
    %567 = vmatpush1.bf16.msra.mxu0 %v397
    %568 = vmatprep.subr.bf16.mxu0 %v402
    %569 = vmatpush1.bf16.msra.mxu0 %v401
    %570 = vmatprep.subr.bf16.mxu0 %v406
    %571 = vmatpush1.bf16.msra.mxu0 %v405
    %572 = vmatprep.subr.bf16.mxu0 %v410
    %573 = vmatpush1.bf16.msra.mxu0 %v409
    %574 = vmatprep.subr.bf16.mxu0 %v414
    %575 = vmatpush1.bf16.msra.mxu0 %v413
    %576 = vmatprep.subr.bf16.mxu0 %v418
    %577 = vmatpush1.bf16.msra.mxu0 %v417
    %578 = vmatprep.subr.bf16.mxu0 %v422
    %579 = vmatpush1.bf16.msra.mxu0 %v421
    %580 = vmatprep.subr.bf16.mxu0 %v426
    %581 = vmatpush1.bf16.msra.mxu0 %v425
    %582 = vmatprep.subr.bf16.mxu0 %v430
    %583 = vmatpush1.bf16.msra.mxu0 %v429
    %584 = vmatprep.subr.bf16.mxu0 %v434
    %585 = vmatpush1.bf16.msra.mxu0 %v433
    %586 = vmatprep.subr.bf16.mxu0 %v438
    %587 = vmatpush1.bf16.msra.mxu0 %v437
    %588 = vmatprep.subr.bf16.mxu0 %v442
    %589 = vmatpush1.bf16.msra.mxu0 %v441
    %590 = vmatprep.subr.bf16.mxu0 %v446
    %591 = vmatpush1.bf16.msra.mxu0 %v445
    %592 = vmatprep.subr.bf16.mxu0 %v450
    %593 = vmatpush1.bf16.msra.mxu0 %v449
    %594 = vmatprep.subr.bf16.mxu0 %v454
    %595 = vmatpush1.bf16.msra.mxu0 %v453
    %596 = vmatprep.subr.bf16.mxu0 %v458
    %597 = vmatpush1.bf16.msra.mxu0 %v457
    %598 = vmatprep.mubr.bf16.mxu0 %v200
    %599 = vmatmul.mubr.bf16.gmra.mrb[0].mxu0 %v199
    %v600 = vpop.f32.mrb[0].mxu0
    %v601 = vadd.f32 %v184, %v600
    %v602 = vpop.f32.mrb[0].mxu0
    %v603 = vadd.f32 %v188, %v602
    %v604 = vpop.f32.mrb[0].mxu0
    %v605 = vadd.f32 %v184, %v604
    %v606 = vpop.f32.mrb[0].mxu0
    %v607 = vadd.f32 %v188, %v606
    %608 = vdwg.mxu0
    %v609 = vmax.f32 %v558, 0.0
    %v610 = vmax.f32 %v560, 0.0
    %v611 = vmax.f32 %v601, 0.0
    %v612 = vmax.f32 %v603, 0.0
    %v613 = vmax.f32 %v562, 0.0
    %v614 = vmax.f32 %v564, 0.0
    %v615 = vmax.f32 %v605, 0.0
    %v616 = vmax.f32 %v607, 0.0
    %v617 = vld [vmem:[#allocation11] sm:$0xff]
    %v618 = vld [vmem:[#allocation11 + $0x8] sm:$0xff]
    %v619 = vld [vmem:[#allocation11 + $0x10] sm:$0xff]
    %v620 = vld [vmem:[#allocation11 + $0x18] sm:$0xff]
    %v621 = vpack.c.bf16 %v613, %v609
    %v622 = vpack.c.bf16 %v614, %v610
    %v623 = vpack.c.bf16 %v615, %v611
    %v624 = vpack.c.bf16 %v616, %v612
    %v625 = vld [vmem:[#allocation8] sm:$0xff]
    %v626 = vld [vmem:[#allocation8 + $0x8] sm:$0xff]
    %v627 = vld [vmem:[#allocation8 + $0x10] sm:$0xff]
    %v628 = vld [vmem:[#allocation8 + $0x18] sm:$0xff]
    %v629 = vld [vmem:[#allocation8 + $0x20] sm:$0xff]
    %v630 = vld [vmem:[#allocation8 + $0x28] sm:$0xff]
    %v631 = vld [vmem:[#allocation8 + $0x30] sm:$0xff]
    %v632 = vld [vmem:[#allocation8 + $0x38] sm:$0xff]
    %v633 = vld [vmem:[#allocation8 + $0x40] sm:$0xff]
    %v634 = vld [vmem:[#allocation8 + $0x48] sm:$0xff]
    %v635 = vld [vmem:[#allocation8 + $0x50] sm:$0xff]
    %v636 = vld [vmem:[#allocation8 + $0x58] sm:$0xff]
    %v637 = vld [vmem:[#allocation8 + $0x60] sm:$0xff]
    %v638 = vld [vmem:[#allocation8 + $0x68] sm:$0xff]
    %v639 = vld [vmem:[#allocation8 + $0x70] sm:$0xff]
    %v640 = vld [vmem:[#allocation8 + $0x78] sm:$0xff]
    %v641 = vld [vmem:[#allocation8 + $0x80] sm:$0xff]
    %v642 = vld [vmem:[#allocation8 + $0x88] sm:$0xff]
    %v643 = vld [vmem:[#allocation8 + $0x90] sm:$0xff]
    %v644 = vld [vmem:[#allocation8 + $0x98] sm:$0xff]
    %v645 = vld [vmem:[#allocation8 + $0xa0] sm:$0xff]
    %v646 = vld [vmem:[#allocation8 + $0xa8] sm:$0xff]
    %v647 = vld [vmem:[#allocation8 + $0xb0] sm:$0xff]
    %v648 = vld [vmem:[#allocation8 + $0xb8] sm:$0xff]
    %v649 = vld [vmem:[#allocation8 + $0xc0] sm:$0xff]
    %v650 = vld [vmem:[#allocation8 + $0xc8] sm:$0xff]
    %v651 = vld [vmem:[#allocation8 + $0xd0] sm:$0xff]
    %v652 = vld [vmem:[#allocation8 + $0xd8] sm:$0xff]
    %v653 = vld [vmem:[#allocation8 + $0xe0] sm:$0xff]
    %v654 = vld [vmem:[#allocation8 + $0xe8] sm:$0xff]
    %v655 = vld [vmem:[#allocation8 + $0xf0] sm:$0xff]
    %v656 = vld [vmem:[#allocation8 + $0xf8] sm:$0xff]
    %v657 = vld [vmem:[#allocation8 + $0x100] sm:$0xff]
    %v658 = vld [vmem:[#allocation8 + $0x108] sm:$0xff]
    %v659 = vld [vmem:[#allocation8 + $0x110] sm:$0xff]
    %v660 = vld [vmem:[#allocation8 + $0x118] sm:$0xff]
    %v661 = vld [vmem:[#allocation8 + $0x120] sm:$0xff]
    %v662 = vld [vmem:[#allocation8 + $0x128] sm:$0xff]
    %v663 = vld [vmem:[#allocation8 + $0x130] sm:$0xff]
    %v664 = vld [vmem:[#allocation8 + $0x138] sm:$0xff]
    %v665 = vld [vmem:[#allocation8 + $0x140] sm:$0xff]
    %v666 = vld [vmem:[#allocation8 + $0x148] sm:$0xff]
    %v667 = vld [vmem:[#allocation8 + $0x150] sm:$0xff]
    %v668 = vld [vmem:[#allocation8 + $0x158] sm:$0xff]
    %v669 = vld [vmem:[#allocation8 + $0x160] sm:$0xff]
    %v670 = vld [vmem:[#allocation8 + $0x168] sm:$0xff]
    %v671 = vld [vmem:[#allocation8 + $0x170] sm:$0xff]
    %v672 = vld [vmem:[#allocation8 + $0x178] sm:$0xff]
    %v673 = vld [vmem:[#allocation8 + $0x180] sm:$0xff]
    %v674 = vld [vmem:[#allocation8 + $0x188] sm:$0xff]
    %v675 = vld [vmem:[#allocation8 + $0x190] sm:$0xff]
    %v676 = vld [vmem:[#allocation8 + $0x198] sm:$0xff]
    %v677 = vld [vmem:[#allocation8 + $0x1a0] sm:$0xff]
    %v678 = vld [vmem:[#allocation8 + $0x1a8] sm:$0xff]
    %v679 = vld [vmem:[#allocation8 + $0x1b0] sm:$0xff]
    %v680 = vld [vmem:[#allocation8 + $0x1b8] sm:$0xff]
    %v681 = vld [vmem:[#allocation8 + $0x1c0] sm:$0xff]
    %v682 = vld [vmem:[#allocation8 + $0x1c8] sm:$0xff]
    %v683 = vld [vmem:[#allocation8 + $0x1d0] sm:$0xff]
    %v684 = vld [vmem:[#allocation8 + $0x1d8] sm:$0xff]
    %v685 = vld [vmem:[#allocation8 + $0x1e0] sm:$0xff]
    %v686 = vld [vmem:[#allocation8 + $0x1e8] sm:$0xff]
    %v687 = vld [vmem:[#allocation8 + $0x1f0] sm:$0xff]
    %v688 = vld [vmem:[#allocation8 + $0x1f8] sm:$0xff]
    %v753 = vunpack.c.l.b16 %v625
    %v754 = vunpack.c.h.b16 %v625
    %v755 = vunpack.c.l.b16 %v626
    %v756 = vunpack.c.h.b16 %v626
    %v757 = vunpack.c.l.b16 %v627
    %v758 = vunpack.c.h.b16 %v627
    %v759 = vunpack.c.l.b16 %v628
    %v760 = vunpack.c.h.b16 %v628
    %v761 = vunpack.c.l.b16 %v629
    %v762 = vunpack.c.h.b16 %v629
    %v763 = vunpack.c.l.b16 %v630
    %v764 = vunpack.c.h.b16 %v630
    %v765 = vunpack.c.l.b16 %v631
    %v766 = vunpack.c.h.b16 %v631
    %v767 = vunpack.c.l.b16 %v632
    %v768 = vunpack.c.h.b16 %v632
    %v769 = vunpack.c.l.b16 %v633
    %v770 = vunpack.c.h.b16 %v633
    %v771 = vunpack.c.l.b16 %v634
    %v772 = vunpack.c.h.b16 %v634
    %v773 = vunpack.c.l.b16 %v635
    %v774 = vunpack.c.h.b16 %v635
    %v775 = vunpack.c.l.b16 %v636
    %v776 = vunpack.c.h.b16 %v636
    %v777 = vunpack.c.l.b16 %v637
    %v778 = vunpack.c.h.b16 %v637
    %v779 = vunpack.c.l.b16 %v638
    %v780 = vunpack.c.h.b16 %v638
    %v781 = vunpack.c.l.b16 %v639
    %v782 = vunpack.c.h.b16 %v639
    %v783 = vunpack.c.l.b16 %v640
    %v784 = vunpack.c.h.b16 %v640
    %v785 = vunpack.c.l.b16 %v641
    %v786 = vunpack.c.h.b16 %v641
    %v787 = vunpack.c.l.b16 %v642
    %v788 = vunpack.c.h.b16 %v642
    %v789 = vunpack.c.l.b16 %v643
    %v790 = vunpack.c.h.b16 %v643
    %v791 = vunpack.c.l.b16 %v644
    %v792 = vunpack.c.h.b16 %v644
    %v793 = vunpack.c.l.b16 %v645
    %v794 = vunpack.c.h.b16 %v645
    %v795 = vunpack.c.l.b16 %v646
    %v796 = vunpack.c.h.b16 %v646
    %v797 = vunpack.c.l.b16 %v647
    %v798 = vunpack.c.h.b16 %v647
    %v799 = vunpack.c.l.b16 %v648
    %v800 = vunpack.c.h.b16 %v648
    %v801 = vunpack.c.l.b16 %v649
    %v802 = vunpack.c.h.b16 %v649
    %v803 = vunpack.c.l.b16 %v650
    %v804 = vunpack.c.h.b16 %v650
    %v805 = vunpack.c.l.b16 %v651
    %v806 = vunpack.c.h.b16 %v651
    %v807 = vunpack.c.l.b16 %v652
    %v808 = vunpack.c.h.b16 %v652
    %v809 = vunpack.c.l.b16 %v653
    %v810 = vunpack.c.h.b16 %v653
    %v811 = vunpack.c.l.b16 %v654
    %v812 = vunpack.c.h.b16 %v654
    %v813 = vunpack.c.l.b16 %v655
    %v814 = vunpack.c.h.b16 %v655
    %v815 = vunpack.c.l.b16 %v656
    %v816 = vunpack.c.h.b16 %v656
    %v817 = vunpack.c.l.b16 %v657
    %v818 = vunpack.c.h.b16 %v657
    %v819 = vunpack.c.l.b16 %v658
    %v820 = vunpack.c.h.b16 %v658
    %v821 = vunpack.c.l.b16 %v659
    %v822 = vunpack.c.h.b16 %v659
    %v823 = vunpack.c.l.b16 %v660
    %v824 = vunpack.c.h.b16 %v660
    %v825 = vunpack.c.l.b16 %v661
    %v826 = vunpack.c.h.b16 %v661
    %v827 = vunpack.c.l.b16 %v662
    %v828 = vunpack.c.h.b16 %v662
    %v829 = vunpack.c.l.b16 %v663
    %v830 = vunpack.c.h.b16 %v663
    %v831 = vunpack.c.l.b16 %v664
    %v832 = vunpack.c.h.b16 %v664
    %v833 = vunpack.c.l.b16 %v665
    %v834 = vunpack.c.h.b16 %v665
    %v835 = vunpack.c.l.b16 %v666
    %v836 = vunpack.c.h.b16 %v666
    %v837 = vunpack.c.l.b16 %v667
    %v838 = vunpack.c.h.b16 %v667
    %v839 = vunpack.c.l.b16 %v668
    %v840 = vunpack.c.h.b16 %v668
    %v841 = vunpack.c.l.b16 %v669
    %v842 = vunpack.c.h.b16 %v669
    %v843 = vunpack.c.l.b16 %v670
    %v844 = vunpack.c.h.b16 %v670
    %v845 = vunpack.c.l.b16 %v671
    %v846 = vunpack.c.h.b16 %v671
    %v847 = vunpack.c.l.b16 %v672
    %v848 = vunpack.c.h.b16 %v672
    %v849 = vunpack.c.l.b16 %v673
    %v850 = vunpack.c.h.b16 %v673
    %v851 = vunpack.c.l.b16 %v674
    %v852 = vunpack.c.h.b16 %v674
    %v853 = vunpack.c.l.b16 %v675
    %v854 = vunpack.c.h.b16 %v675
    %v855 = vunpack.c.l.b16 %v676
    %v856 = vunpack.c.h.b16 %v676
    %v857 = vunpack.c.l.b16 %v677
    %v858 = vunpack.c.h.b16 %v677
    %v859 = vunpack.c.l.b16 %v678
    %v860 = vunpack.c.h.b16 %v678
    %v861 = vunpack.c.l.b16 %v679
    %v862 = vunpack.c.h.b16 %v679
    %v863 = vunpack.c.l.b16 %v680
    %v864 = vunpack.c.h.b16 %v680
    %v865 = vunpack.c.l.b16 %v681
    %v866 = vunpack.c.h.b16 %v681
    %v867 = vunpack.c.l.b16 %v682
    %v868 = vunpack.c.h.b16 %v682
    %v869 = vunpack.c.l.b16 %v683
    %v870 = vunpack.c.h.b16 %v683
    %v871 = vunpack.c.l.b16 %v684
    %v872 = vunpack.c.h.b16 %v684
    %v873 = vunpack.c.l.b16 %v685
    %v874 = vunpack.c.h.b16 %v685
    %v875 = vunpack.c.l.b16 %v686
    %v876 = vunpack.c.h.b16 %v686
    %v877 = vunpack.c.l.b16 %v687
    %v878 = vunpack.c.h.b16 %v687
    %v879 = vunpack.c.l.b16 %v688
    %v880 = vunpack.c.h.b16 %v688
    %v881 = vpack.c.b16 %v755, %v753
    %v882 = vpack.c.b16 %v756, %v754
    %v883 = vpack.c.b16 %v759, %v757
    %v884 = vpack.c.b16 %v760, %v758
    %v885 = vpack.c.b16 %v763, %v761
    %v886 = vpack.c.b16 %v764, %v762
    %v887 = vpack.c.b16 %v767, %v765
    %v888 = vpack.c.b16 %v768, %v766
    %v889 = vpack.c.b16 %v771, %v769
    %v890 = vpack.c.b16 %v772, %v770
    %v891 = vpack.c.b16 %v775, %v773
    %v892 = vpack.c.b16 %v776, %v774
    %v893 = vpack.c.b16 %v779, %v777
    %v894 = vpack.c.b16 %v780, %v778
    %v895 = vpack.c.b16 %v783, %v781
    %v896 = vpack.c.b16 %v784, %v782
    %v897 = vpack.c.b16 %v787, %v785
    %v898 = vpack.c.b16 %v788, %v786
    %v899 = vpack.c.b16 %v791, %v789
    %v900 = vpack.c.b16 %v792, %v790
    %v901 = vpack.c.b16 %v795, %v793
    %v902 = vpack.c.b16 %v796, %v794
    %v903 = vpack.c.b16 %v799, %v797
    %v904 = vpack.c.b16 %v800, %v798
    %v905 = vpack.c.b16 %v803, %v801
    %v906 = vpack.c.b16 %v804, %v802
    %v907 = vpack.c.b16 %v807, %v805
    %v908 = vpack.c.b16 %v808, %v806
    %v909 = vpack.c.b16 %v811, %v809
    %v910 = vpack.c.b16 %v812, %v810
    %v911 = vpack.c.b16 %v815, %v813
    %v912 = vpack.c.b16 %v816, %v814
    %v913 = vpack.c.b16 %v819, %v817
    %v914 = vpack.c.b16 %v820, %v818
    %v915 = vpack.c.b16 %v823, %v821
    %v916 = vpack.c.b16 %v824, %v822
    %v917 = vpack.c.b16 %v827, %v825
    %v918 = vpack.c.b16 %v828, %v826
    %v919 = vpack.c.b16 %v831, %v829
    %v920 = vpack.c.b16 %v832, %v830
    %v921 = vpack.c.b16 %v835, %v833
    %v922 = vpack.c.b16 %v836, %v834
    %v923 = vpack.c.b16 %v839, %v837
    %v924 = vpack.c.b16 %v840, %v838
    %v925 = vpack.c.b16 %v843, %v841
    %v926 = vpack.c.b16 %v844, %v842
    %v927 = vpack.c.b16 %v847, %v845
    %v928 = vpack.c.b16 %v848, %v846
    %v929 = vpack.c.b16 %v851, %v849
    %v930 = vpack.c.b16 %v852, %v850
    %v931 = vpack.c.b16 %v855, %v853
    %v932 = vpack.c.b16 %v856, %v854
    %v933 = vpack.c.b16 %v859, %v857
    %v934 = vpack.c.b16 %v860, %v858
    %v935 = vpack.c.b16 %v863, %v861
    %v936 = vpack.c.b16 %v864, %v862
    %v937 = vpack.c.b16 %v867, %v865
    %v938 = vpack.c.b16 %v868, %v866
    %v939 = vpack.c.b16 %v871, %v869
    %v940 = vpack.c.b16 %v872, %v870
    %v941 = vpack.c.b16 %v875, %v873
    %v942 = vpack.c.b16 %v876, %v874
    %v943 = vpack.c.b16 %v879, %v877
    %v944 = vpack.c.b16 %v880, %v878
    %1009 = vmatprep.subr.bf16.mxu0 %v882
    %1010 = vmatpush1.bf16.msra.mxu0 %v881
    %1011 = vmatprep.subr.bf16.mxu0 %v884
    %1012 = vmatpush1.bf16.msra.mxu0 %v883
    %1013 = vmatprep.subr.bf16.mxu0 %v886
    %1014 = vmatpush1.bf16.msra.mxu0 %v885
    %1015 = vmatprep.subr.bf16.mxu0 %v888
    %1016 = vmatpush1.bf16.msra.mxu0 %v887
    %1017 = vmatprep.subr.bf16.mxu0 %v890
    %1018 = vmatpush1.bf16.msra.mxu0 %v889
    %1019 = vmatprep.subr.bf16.mxu0 %v892
    %1020 = vmatpush1.bf16.msra.mxu0 %v891
    %1021 = vmatprep.subr.bf16.mxu0 %v894
    %1022 = vmatpush1.bf16.msra.mxu0 %v893
    %1023 = vmatprep.subr.bf16.mxu0 %v896
    %1024 = vmatpush1.bf16.msra.mxu0 %v895
    %1025 = vmatprep.subr.bf16.mxu0 %v898
    %1026 = vmatpush1.bf16.msra.mxu0 %v897
    %1027 = vmatprep.subr.bf16.mxu0 %v900
    %1028 = vmatpush1.bf16.msra.mxu0 %v899
    %1029 = vmatprep.subr.bf16.mxu0 %v902
    %1030 = vmatpush1.bf16.msra.mxu0 %v901
    %1031 = vmatprep.subr.bf16.mxu0 %v904
    %1032 = vmatpush1.bf16.msra.mxu0 %v903
    %1033 = vmatprep.subr.bf16.mxu0 %v906
    %1034 = vmatpush1.bf16.msra.mxu0 %v905
    %1035 = vmatprep.subr.bf16.mxu0 %v908
    %1036 = vmatpush1.bf16.msra.mxu0 %v907
    %1037 = vmatprep.subr.bf16.mxu0 %v910
    %1038 = vmatpush1.bf16.msra.mxu0 %v909
    %1039 = vmatprep.subr.bf16.mxu0 %v912
    %1040 = vmatpush1.bf16.msra.mxu0 %v911
    %1041 = vmatprep.mubr.bf16.mxu0 %v622
    %1042 = vmatmul.mubr.bf16.gmra.mrb[0].mxu0 %v621
    %v1043 = vpop.f32.mrb[0].mxu0
    %v1044 = vadd.f32 0.0, %v1043
    %v1045 = vpop.f32.mrb[0].mxu0
    %v1046 = vadd.f32 0.0, %v1045
    %v1047 = vpop.f32.mrb[0].mxu0
    %v1048 = vadd.f32 0.0, %v1047
    %v1049 = vpop.f32.mrb[0].mxu0
    %v1050 = vadd.f32 0.0, %v1049
    %1051 = vdwg.mxu0
    %1052 = vmatprep.subr.bf16.mxu0 %v914
    %1053 = vmatpush1.bf16.msra.mxu0 %v913
    %1054 = vmatprep.subr.bf16.mxu0 %v916
    %1055 = vmatpush1.bf16.msra.mxu0 %v915
    %1056 = vmatprep.subr.bf16.mxu0 %v918
    %1057 = vmatpush1.bf16.msra.mxu0 %v917
    %1058 = vmatprep.subr.bf16.mxu0 %v920
    %1059 = vmatpush1.bf16.msra.mxu0 %v919
    %1060 = vmatprep.subr.bf16.mxu0 %v922
    %1061 = vmatpush1.bf16.msra.mxu0 %v921
    %1062 = vmatprep.subr.bf16.mxu0 %v924
    %1063 = vmatpush1.bf16.msra.mxu0 %v923
    %1064 = vmatprep.subr.bf16.mxu0 %v926
    %1065 = vmatpush1.bf16.msra.mxu0 %v925
    %1066 = vmatprep.subr.bf16.mxu0 %v928
    %1067 = vmatpush1.bf16.msra.mxu0 %v927
    %1068 = vmatprep.subr.bf16.mxu0 %v930
    %1069 = vmatpush1.bf16.msra.mxu0 %v929
    %1070 = vmatprep.subr.bf16.mxu0 %v932
    %1071 = vmatpush1.bf16.msra.mxu0 %v931
    %1072 = vmatprep.subr.bf16.mxu0 %v934
    %1073 = vmatpush1.bf16.msra.mxu0 %v933
    %1074 = vmatprep.subr.bf16.mxu0 %v936
    %1075 = vmatpush1.bf16.msra.mxu0 %v935
    %1076 = vmatprep.subr.bf16.mxu0 %v938
    %1077 = vmatpush1.bf16.msra.mxu0 %v937
    %1078 = vmatprep.subr.bf16.mxu0 %v940
    %1079 = vmatpush1.bf16.msra.mxu0 %v939
    %1080 = vmatprep.subr.bf16.mxu0 %v942
    %1081 = vmatpush1.bf16.msra.mxu0 %v941
    %1082 = vmatprep.subr.bf16.mxu0 %v944
    %1083 = vmatpush1.bf16.msra.mxu0 %v943
    %1084 = vmatprep.mubr.bf16.mxu0 %v624
    %1085 = vmatmul.mubr.bf16.gmra.mrb[0].mxu0 %v623
    %v1086 = vpop.f32.mrb[0].mxu0
    %v1087 = vadd.f32 %v1044, %v1086
    %v1088 = vpop.f32.mrb[0].mxu0
    %v1089 = vadd.f32 %v1046, %v1088
    %v1090 = vpop.f32.mrb[0].mxu0
    %v1091 = vadd.f32 %v1048, %v1090
    %v1092 = vpop.f32.mrb[0].mxu0
    %v1093 = vadd.f32 %v1050, %v1092
    %1094 = vdwg.mxu0
    %v1095 = vadd.f32 %v617, %v1087
    %v1096 = vadd.f32 %v618, %v1089
    %v1097 = vadd.f32 %v619, %v1091
    %v1098 = vadd.f32 %v620, %v1093
    %1099 = vst [vmem:[#allocation11] sm:$0xff] %v1095
    %1100 = vst [vmem:[#allocation11 + $0x8] sm:$0xff] %v1096
    %1101 = vst [vmem:[#allocation11 + $0x10] sm:$0xff] %v1097
    %1102 = vst [vmem:[#allocation11 + $0x18] sm:$0xff] %v1098
    // Predicated region
    $region46: #{tpu_custom_call.1} parent=1 // pred_check
      _
    $region47: #{tpu_custom_call.1} parent=1 // pred_check_branch
      %1104 = sbr.rel (0) target = $region49
    $region48: #{tpu_custom_call.1} parent=1 // pred_region
      %s1106 = ssub.s32 512, 512
      %1107 = vsyncadd [#allocation4], %s1106
      %s1108 = sshll.u32 [#allocation11], 4
      %s1109 = int_to_ptr.vmem [resolvable:$true] %s1108
      %1114 = dma.vmem_to_hbm [thread:$0]  %s1109, 512, %s5, [#allocation4], 256, 256, 16
    $region49: #{tpu_custom_call.1} parent=1 // pred_fallthru
      _
    // Predicated region
    $region50: #{tpu_custom_call.1} parent=1 // pred_check
      _
    $region51: #{tpu_custom_call.1} parent=1 // pred_check_branch
      %1116 = sbr.rel (0) target = $region53
    $region52: #{tpu_custom_call.1} parent=1 // pred_region
      %1117 = dma.done [#allocation4], 512
    $region53: #{tpu_custom_call.1} parent=1 // pred_fallthru
      _
    %1118 = vsyncpa [#allocation3], 1
    %1119 = vsyncpa [#allocation6], 1
    %1120 = vsyncpa [#allocation9], 1
    %1121 = vsyncpa [#allocation4], 1

</llo_original>
